<compile_context>
chip_gen: v5e
topology: v5e:2x2
jax: 0.10.0
libtpu: 0.0.40
codegen_flags: <defaults>
</compile_context>

<pallas_src>
import functools

import jax
import jax.numpy as jnp
from jax.experimental import pallas as pl
from jax.experimental.pallas import tpu as pltpu


# ---------------------------------------------------------------------------
# Static network configuration (synthetic "loss network")
# ---------------------------------------------------------------------------
C_IN = 3            # input channels (RGB, like the torchvision model)
C_CONV = 32         # conv output channels (true)
FEAT_DIM = 64       # FC output features (true)
KLANE = 32          # lanes per pixel group: 27 taps + 1 bias lane, padded to 32
PACK = 4            # pixels packed per 128-lane row
LANES = PACK * KLANE        # 128 (fully lane-dense LHS / conv output)
F_PAD = 128                 # FC output padded to 128 lanes


def _round_up(x, m):
    return ((x + m - 1) // m) * m


# ---------------------------------------------------------------------------
# Single fused kernel: conv (as packed matmul, bias folded in) + ReLU +
# global-average-pool accumulation + FC.  grid = (batch, row_tiles).
# ---------------------------------------------------------------------------
def _conv_pool_fc_kernel(patches_ref, w_conv_ref, w_fc_ref, b_fc_ref,
                         fc_ref, acc_ref, *, inv_hw):
    t = pl.program_id(1)

    @pl.when(t == 0)
    def _init():
        acc_ref[...] = jnp.zeros_like(acc_ref)

    # [row_tile, 128] bf16 @ [128, 128] bf16 -> f32 on the MXU.
    # Each 32-lane group of an LHS row is one pixel's (27 taps + bias-one +
    # zero pad); the block-diagonal weight keeps the 4 packed pixels in
    # disjoint 32-lane output groups, and the folded bias row guarantees that
    # zero-padded rows stay exactly 0 through the ReLU (no masking needed).
    feat = jnp.dot(patches_ref[0], w_conv_ref[...],
                   preferred_element_type=jnp.float32)
    feat = jnp.maximum(feat, 0.0)
    acc_ref[...] += jnp.sum(feat, axis=0, keepdims=True)   # fused GAP partial

    @pl.when(t == pl.num_programs(1) - 1)
    def _finalize():
        # GAP + FC; the 4x-tiled FC weight sums the 4 pixel groups back up.
        pooled = acc_ref[...] * inv_hw                       # [1, 128] f32
        fc = jnp.dot(pooled, w_fc_ref[...],
                     preferred_element_type=jnp.float32) + b_fc_ref[...]
        fc_ref[...] = fc.reshape(1, 1, -1)


def _pick_row_tile(m, vmem_budget_bytes=16 << 20, hard_cap=16384):
    """Largest 8-aligned packed-row tile whose double-buffered bf16 block
    (row_tile * 128 lanes * 2 B * 2 buffers) fits the VMEM budget."""
    per_row_bytes = LANES * 2
    cap = min(hard_cap, vmem_budget_bytes // (2 * per_row_bytes))
    cap = max(8, (cap // 8) * 8)
    return min(_round_up(m, 8), cap)


def conv_pool_fc(patches, w_conv_big, w_fc_big, b_fc, hw):
    """patches: [B, M, 128] bf16 (4 pixels per row) -> FC features [B, F_PAD] f32."""
    B, M, L = patches.shape
    row_tile = _pick_row_tile(M)
    num_t = pl.cdiv(M, row_tile)
    m_pad = num_t * row_tile
    if m_pad != M:
        # padded rows have a zero bias-lane -> contribute exactly 0 to the pool
        patches = jnp.pad(patches, ((0, 0), (0, m_pad - M), (0, 0)))

    kernel = functools.partial(_conv_pool_fc_kernel, inv_hw=1.0 / float(hw))
    out = pl.pallas_call(
        kernel,
        out_shape=jax.ShapeDtypeStruct((B, 1, F_PAD), jnp.float32),
        grid_spec=pltpu.PrefetchScalarGridSpec(
            num_scalar_prefetch=0,
            grid=(B, num_t),
            in_specs=[
                pl.BlockSpec((1, row_tile, L), lambda bi, t: (bi, t, 0)),
                pl.BlockSpec((L, L), lambda bi, t: (0, 0)),        # conv W pinned
                pl.BlockSpec((L, F_PAD), lambda bi, t: (0, 0)),    # FC W pinned
                pl.BlockSpec((1, F_PAD), lambda bi, t: (0, 0)),    # FC bias pinned
            ],
            out_specs=pl.BlockSpec((1, 1, F_PAD), lambda bi, t: (bi, 0, 0)),
            scratch_shapes=[pltpu.VMEM((1, LANES), jnp.float32)],
        ),
        compiler_params=pltpu.CompilerParams(
            dimension_semantics=("parallel", "arbitrary"),
            vmem_limit_bytes=32 << 20),
    )(patches, w_conv_big, w_fc_big, b_fc)
    return out.reshape(B, F_PAD)


# ---------------------------------------------------------------------------
# Wrapper-side patch construction (transpose-free, bf16, lane-packed)
# ---------------------------------------------------------------------------
def build_packed_patches(x):
    """x: [B, C_IN, H, W] f32 -> lane-packed patches [B, ceil(HW/4), 128] bf16."""
    B, C, H, W = x.shape
    hw = H * W
    xp = jnp.pad(x, ((0, 0), (0, 0), (1, 1), (1, 1)))
    xp = jnp.transpose(xp, (0, 2, 3, 1)).astype(jnp.bfloat16)    # NHWC, bf16 early
    taps = [xp[:, i:i + H, j:j + W, :] for i in range(3) for j in range(3)]
    p = jnp.stack(taps, axis=-1)            # [B, H, W, C, 9] — born in final layout
    p = p.reshape(B, hw, C * 9)             # k = c*9 + (3*di + dj)
    ones = jnp.ones((B, hw, 1), jnp.bfloat16)          # bias lane at k = 27
    p = jnp.concatenate([p, ones], axis=-1)
    p = jnp.pad(p, ((0, 0), (0, 0), (0, KLANE - (C * 9 + 1))))   # -> 32 lanes/pixel
    hw4 = _round_up(hw, PACK)
    if hw4 != hw:
        p = jnp.pad(p, ((0, 0), (0, hw4 - hw), (0, 0)))
    return p.reshape(B, hw4 // PACK, PACK * KLANE), hw           # [B, M, 128]


# ---------------------------------------------------------------------------
# Parameter setup and loss
# ---------------------------------------------------------------------------
def make_params(key):
    k1, k2, k3, k4 = jax.random.split(key, 4)
    w_conv = jax.random.normal(k1, (C_CONV, C_IN, 3, 3), jnp.float32) * 0.1
    b_conv = jax.random.normal(k2, (C_CONV,), jnp.float32) * 0.1
    w_fc = jax.random.normal(k3, (C_CONV, FEAT_DIM), jnp.float32) * 0.1
    b_fc = jax.random.normal(k4, (FEAT_DIM,), jnp.float32) * 0.1

    # [27, 32] conv matrix + bias row (driven by the ones lane), pad to [32, 32]
    w_mat = w_conv.reshape(C_CONV, C_IN * 9).T
    w_aug = jnp.concatenate([w_mat, b_conv[None, :]], axis=0)            # [28, 32]
    w_aug = jnp.pad(w_aug, ((0, KLANE - w_aug.shape[0]), (0, 0)))        # [32, 32]
    # 4-way block-diagonal: each packed pixel maps to its own 32-lane output group
    w_conv_big = jnp.kron(jnp.eye(PACK, dtype=jnp.float32), w_aug)       # [128, 128]

    # FC weight tiled over the 4 pixel groups (re-sums the groups); padded FC
    # lanes are exactly zero so the MSE is unaffected.
    w_fc_big = jnp.pad(jnp.tile(w_fc, (PACK, 1)),
                       ((0, 0), (0, F_PAD - FEAT_DIM)))                  # [128, 128]
    b_fc_p = jnp.pad(b_fc[None, :], ((0, 0), (0, F_PAD - FEAT_DIM)))     # [1, 128]

    kernel_params = {
        "w_conv_big": w_conv_big.astype(jnp.bfloat16),   # bf16 MXU fast path
        "w_fc_big": w_fc_big,                            # f32 finalize
        "b_fc": b_fc_p,                                  # f32
    }
    raw_params = (w_conv, b_conv, w_fc, b_fc)
    return kernel_params, raw_params


def perceptual_loss(params, output, label):
    n = output.shape[0]
    x = jnp.concatenate([output, label], axis=0)             # [2N, C, H, W]
    patches, hw = build_packed_patches(x)                    # [2N, M, 128] bf16
    fc = conv_pool_fc(patches, params["w_conv_big"], params["w_fc_big"],
                      params["b_fc"], hw)                    # [2N, F_PAD] f32
    d = fc[:n] - fc[n:]                                      # tiny jnp epilogue
    return jnp.sum(d * d) / float(n * FEAT_DIM)              # == feature.nelement()


def reference_loss(raw_params, output, label):
    """Pure-jnp f32 reference of the synthetic loss network (tolerance check)."""
    w_conv, b_conv, w_fc, b_fc = raw_params

    def feats(x):
        y = jax.lax.conv_general_dilated(
            x, w_conv, window_strides=(1, 1), padding="SAME",
            dimension_numbers=("NCHW", "OIHW", "NCHW"))
        y = jnp.maximum(y + b_conv[None, :, None, None], 0.0)
        y = y.mean(axis=(2, 3))
        return y @ w_fc + b_fc[None, :]

    fo, fl = feats(output), feats(label)
    return jnp.sum((fo - fl) ** 2) / fo.size


if __name__ == "__main__":
    key = jax.random.PRNGKey(0)
    kp, kx, ky = jax.random.split(key, 3)

    kernel_params, raw_params = make_params(kp)

    # small deterministic inputs consistent with an image loss net: NCHW
    output = jax.random.normal(kx, (2, 3, 16, 16), jnp.float32)
    label = jax.random.normal(ky, (2, 3, 16, 16), jnp.float32)

    loss_fn = jax.jit(perceptual_loss)
    loss = jax.block_until_ready(loss_fn(kernel_params, output, label))

    assert loss.shape == () and bool(jnp.isfinite(loss))
    # tolerance check vs f32 reference (bf16 MXU inputs, f32 accumulate)
    ref = reference_loss(raw_params, output, label)
    assert float(jnp.abs(loss - ref)) <= 5e-2 * float(jnp.abs(ref)) + 1e-4, (loss, ref)
    print("KERNEL_OK")
</pallas_src>

<mosaic_0001>
module attributes {stable_mosaic.version = 11 : i64} {
  func.func @_conv_pool_fc_kernel(%arg0: i32, %arg1: i32, %arg2: memref<1x64x128xbf16, #tpu.memory_space<vmem>>, %arg3: memref<128x128xbf16, #tpu.memory_space<vmem>>, %arg4: memref<128x128xf32, #tpu.memory_space<vmem>>, %arg5: memref<1x128xf32, #tpu.memory_space<vmem>>, %arg6: memref<1x1x128xf32, #tpu.memory_space<vmem>>, %arg7: memref<1x128xf32, #tpu.memory_space<vmem>>) attributes {dimension_semantics = [#tpu.dimension_semantics<parallel>, #tpu.dimension_semantics<arbitrary>], iteration_bounds = array<i64: 4, 1>, scalar_prefetch = 0 : i64, scratch_operands = 1 : i64, tpu.core_type = #tpu.core_type<tc>, window_params = [{transform_indices = @transform_0, window_bounds = array<i64: 1, 64, 128>}, {pipeline_mode = #tpu.pipeline_mode<synchronous>, transform_indices = @transform_1, window_bounds = array<i64: 128, 128>}, {pipeline_mode = #tpu.pipeline_mode<synchronous>, transform_indices = @transform_2, window_bounds = array<i64: 128, 128>}, {pipeline_mode = #tpu.pipeline_mode<synchronous>, transform_indices = @transform_3, window_bounds = array<i64: 1, 128>}, {transform_indices = @transform_4, window_bounds = array<i64: 1, 1, 128>}]} {
    %c0_i32 = arith.constant 0 : i32
    %0 = arith.cmpi eq, %arg1, %c0_i32 : i32
    %1 = arith.extui %0 : i1 to i32
    %c0_i32_0 = arith.constant 0 : i32
    %2 = arith.cmpi ne, %1, %c0_i32_0 : i32
    scf.if %2 {
      %cst_13 = arith.constant 0.000000e+00 : f32
      %17 = vector.broadcast %cst_13 : f32 to vector<1x128xf32>
      %c0_14 = arith.constant 0 : index
      %c0_15 = arith.constant 0 : index
      %18 = vector.load %arg7[%c0_14, %c0_15] : memref<1x128xf32, #tpu.memory_space<vmem>>, vector<1x128xf32>
      tpu.vector_store %arg7[%c0_14, %c0_15], %17 {strides = array<i32>} : memref<1x128xf32, #tpu.memory_space<vmem>>, vector<1x128xf32>,
    } else {
    }
    %c0 = arith.constant 0 : index
    %c0_1 = arith.constant 0 : index
    %c0_2 = arith.constant 0 : index
    %3 = vector.load %arg2[%c0, %c0_1, %c0_2] : memref<1x64x128xbf16, #tpu.memory_space<vmem>>, vector<1x64x128xbf16>
    %4 = vector.shape_cast %3 : vector<1x64x128xbf16> to vector<64x128xbf16>
    %c0_3 = arith.constant 0 : index
    %c0_4 = arith.constant 0 : index
    %5 = vector.load %arg3[%c0_3, %c0_4] : memref<128x128xbf16, #tpu.memory_space<vmem>>, vector<128x128xbf16>
    %cst = arith.constant dense<0.000000e+00> : vector<64x128xf32>
    %6 = tpu.matmul %4, %5, %cst {dimension_numbers = #tpu.dot_dimension_numbers<[1], [0], [0], [1], [0, 0, 1, 1], [], []>} : vector<64x128xbf16>, vector<128x128xbf16>, vector<64x128xf32> -> vector<64x128xf32>
    %cst_5 = arith.constant 0.000000e+00 : f32
    %7 = vector.broadcast %cst_5 : f32 to vector<64x128xf32>
    %8 = arith.maximumf %6, %7 : vector<64x128xf32>
    %c0_6 = arith.constant 0 : index
    %c0_7 = arith.constant 0 : index
    %9 = vector.load %arg7[%c0_6, %c0_7] : memref<1x128xf32, #tpu.memory_space<vmem>>, vector<1x128xf32>
    %cst_8 = arith.constant dense<0.000000e+00> : vector<128xf32>
    %10 = vector.multi_reduction <add>, %8, %cst_8 [0] : vector<64x128xf32> to vector<128xf32>
    %11 = vector.shape_cast %10 : vector<128xf32> to vector<1x128xf32>
    %12 = arith.addf %9, %11 : vector<1x128xf32>
    %c0_9 = arith.constant 0 : index
    %c0_10 = arith.constant 0 : index
    %13 = vector.load %arg7[%c0_9, %c0_10] : memref<1x128xf32, #tpu.memory_space<vmem>>, vector<1x128xf32>
    tpu.vector_store %arg7[%c0_9, %c0_10], %12 {strides = array<i32>} : memref<1x128xf32, #tpu.memory_space<vmem>>, vector<1x128xf32>,
    %c0_i32_11 = arith.constant 0 : i32
    %14 = arith.cmpi eq, %arg1, %c0_i32_11 : i32
    %15 = arith.extui %14 : i1 to i32
    %c0_i32_12 = arith.constant 0 : i32
    %16 = arith.cmpi ne, %15, %c0_i32_12 : i32
    scf.if %16 {
      %c0_13 = arith.constant 0 : index
      %c0_14 = arith.constant 0 : index
      %17 = vector.load %arg7[%c0_13, %c0_14] : memref<1x128xf32, #tpu.memory_space<vmem>>, vector<1x128xf32>
      %cst_15 = arith.constant 3.906250e-03 : f32
      %18 = vector.broadcast %cst_15 : f32 to vector<1x128xf32>
      %19 = arith.mulf %17, %18 : vector<1x128xf32>
      %c0_16 = arith.constant 0 : index
      %c0_17 = arith.constant 0 : index
      %20 = vector.load %arg4[%c0_16, %c0_17] : memref<128x128xf32, #tpu.memory_space<vmem>>, vector<128x128xf32>
      %cst_18 = arith.constant dense<0.000000e+00> : vector<1x128xf32>
      %21 = tpu.matmul %19, %20, %cst_18 {dimension_numbers = #tpu.dot_dimension_numbers<[1], [0], [0], [1], [0, 0, 1, 1], [], []>} : vector<1x128xf32>, vector<128x128xf32>, vector<1x128xf32> -> vector<1x128xf32>
      %c0_19 = arith.constant 0 : index
      %c0_20 = arith.constant 0 : index
      %22 = vector.load %arg5[%c0_19, %c0_20] : memref<1x128xf32, #tpu.memory_space<vmem>>, vector<1x128xf32>
      %23 = arith.addf %21, %22 : vector<1x128xf32>
      %24 = vector.shape_cast %23 : vector<1x128xf32> to vector<1x1x128xf32>
      %c0_21 = arith.constant 0 : index
      %c0_22 = arith.constant 0 : index
      %c0_23 = arith.constant 0 : index
      %25 = vector.load %arg6[%c0_21, %c0_22, %c0_23] : memref<1x1x128xf32, #tpu.memory_space<vmem>>, vector<1x1x128xf32>
      tpu.vector_store %arg6[%c0_21, %c0_22, %c0_23], %24 {strides = array<i32>} : memref<1x1x128xf32, #tpu.memory_space<vmem>>, vector<1x1x128xf32>,
    } else {
    }
    return
  }
  func.func @transform_0(%arg0: i32, %arg1: i32) -> (i32, i32, i32) {
    %c0_i32 = arith.constant 0 : i32
    %c0_i32_0 = arith.constant 0 : i32
    return %arg0, %arg1, %c0_i32 : i32, i32, i32
  }
  func.func @transform_1(%arg0: i32, %arg1: i32) -> (i32, i32) {
    %c0_i32 = arith.constant 0 : i32
    %c0_i32_0 = arith.constant 0 : i32
    %c0_i32_1 = arith.constant 0 : i32
    return %c0_i32, %c0_i32_0 : i32, i32
  }
  func.func @transform_2(%arg0: i32, %arg1: i32) -> (i32, i32) {
    %c0_i32 = arith.constant 0 : i32
    %c0_i32_0 = arith.constant 0 : i32
    %c0_i32_1 = arith.constant 0 : i32
    return %c0_i32, %c0_i32_0 : i32, i32
  }
  func.func @transform_3(%arg0: i32, %arg1: i32) -> (i32, i32) {
    %c0_i32 = arith.constant 0 : i32
    %c0_i32_0 = arith.constant 0 : i32
    %c0_i32_1 = arith.constant 0 : i32
    return %c0_i32, %c0_i32_0 : i32, i32
  }
  func.func @transform_4(%arg0: i32, %arg1: i32) -> (i32, i32, i32) {
    %c0_i32 = arith.constant 0 : i32
    %c0_i32_0 = arith.constant 0 : i32
    %c0_i32_1 = arith.constant 0 : i32
    return %arg0, %c0_i32, %c0_i32_0 : i32, i32, i32
  }
}

</mosaic_0001>

<llo_original>
// kernel: perceptual_loss.1
$region0: #{perceptual_loss.1}
  #allocation0 [shape = 'u32[]', space=smem, size = 0x4, offset = 0x4, fixed_abs, tag = 'smem constant byte address 0x4 - core index']
  #allocation1 [shape = 'u32[72,128]{1,0:T(1,128)}', space=vmem, size = 0x9000, scoped, tag = 'internal scratch']
  #allocation2 [shape = 'f32[1,128]{1,0:T(1,128)}', space=vmem, size = 0x200, scoped, tag = 'scratch operand']
  %s0 = inlined_call_operand.vmem [shape: bf16[4,64,128], index: 0, kind: input, shape index: {}]
  %s1 = inlined_call_operand.vmem [shape: bf16[128,128], index: 1, kind: input, shape index: {}]
  %s2 = inlined_call_operand.vmem [shape: f32[128,128], index: 2, kind: input, shape index: {}]
  %s3 = inlined_call_operand.vmem [shape: f32[1,128], index: 3, kind: input, shape index: {}]
  %s4 = inlined_call_operand.vmem [shape: f32[4,1,128], index: 4, kind: output, shape index: {}]
  %s5 = sld [smem:[#allocation0]]
  $region57: #{perceptual_loss.1} parent=0
    _
  %s7 = ssub.s32 1, %s5
  %s8 = scalar_select 0, %s7, %s5
  loop: start=0, step=1, limit=6
  $region2: #{perceptual_loss.1} parent=0 // loop_pre_header
    _
  $region3: #{perceptual_loss.1} parent=0 // loop_header
    %s10 = sphi 0, %s14
    %p11 = scmp.ge.s32.totalorder %s10, 6
    %s17 = sphi 0, %s29
    %s18 = sphi 0, %s25
    %s19 = sphi 0, %s17
    %s20 = sphi 0, %s18
    %s21 = sphi 0, %s19
    %s22 = sphi 0, %s20
    %s34 = sphi 0, %s36
    %s37 = sphi 0, %s34
    %s38 = sphi 0, %s37
    %s54 = sphi 0, %s38
    %s58 = sphi 0, %s58
    %s60 = sphi 0, %s58
    %s61 = sphi 0, %s60
    %s75 = sphi 0, %s61
    %s79 = sphi 0, %s79
    %s81 = sphi 0, %s79
    %s82 = sphi 0, %s81
    %s96 = sphi 0, %s82
    %s100 = sphi 0, %s100
    %s102 = sphi 0, %s100
    %s103 = sphi 0, %s102
    %s117 = sphi 0, %s103
    %s123 = sphi 0, %s125
    %s126 = sphi 0, %s123
    %s127 = sphi 0, %s126
    %s143 = sphi 0, %s127
  $region4: #{perceptual_loss.1} parent=0 // loop_header_branch
    %13 = sbr.rel (%p11) target = $region8
  $region5: #{perceptual_loss.1} parent=0 // loop_body
    %s15 = ssub.s32 %s10, 1
    %s16 = ssub.s32 %s10, 2
    %s23 = sadd.s32 1, %s18
    %p24 = scmp.ge.s32.totalorder %s23, 1
    %s25 = scalar_select %p24, 0, %s23
    %s26 = sadd.s32 1, %s17
    %s27 = scalar_select %p24, %s26, %s17
    %p28 = scmp.ge.s32.totalorder %s27, 4
    %s29 = scalar_select %p28, 0, %s27
    %s30 = ssub.s32 %s17, %s29
    %s31 = ssub.s32 %s18, %s25
    %s32 = sor.u32 %s30, %s31
    %p33 = scmp.eq.s32.totalorder %s32, 0
    %s35 = sadd.s32 %s34, 1
    %s36 = scalar_select %p33, %s34, %s35
    %p39 = pneg %p33
    %p40 = scmp.eq.s32.totalorder %s10, 3
    %p41 = por %p39, %p40
    %p42 = scmp.ne.s32.totalorder %s34, %s37
    %p43 = scmp.eq.s32.totalorder %s10, 0
    %p44 = por %p42, %p43
    %p45 = scmp.ne.s32.totalorder %s34, %s37
    %p46 = scmp.eq.s32.totalorder %s15, 3
    %p47 = por %p45, %p46
    %p48 = scmp.ne.s32.totalorder %s37, %s38
    %p49 = scmp.eq.s32.totalorder %s15, 0
    %p50 = por %p48, %p49
    %p51 = scmp.ne.s32.totalorder %s37, %s38
    %p52 = scmp.eq.s32.totalorder %s16, 3
    %p53 = por %p51, %p52
    %p55 = scmp.ne.s32.totalorder %s38, %s54
    %p56 = scmp.eq.s32.totalorder %s16, 0
    %p57 = por %p55, %p56
    %s59 = sadd.s32 %s58, 1
    %p62 = scmp.eq.s32.totalorder %s10, 3
    %p63 = scmp.ne.s32.totalorder %s58, %s60
    %p64 = scmp.eq.s32.totalorder %s10, 0
    %p65 = por %p63, %p64
    %p66 = scmp.ne.s32.totalorder %s58, %s60
    %p67 = scmp.eq.s32.totalorder %s15, 3
    %p68 = por %p66, %p67
    %p69 = scmp.ne.s32.totalorder %s60, %s61
    %p70 = scmp.eq.s32.totalorder %s15, 0
    %p71 = por %p69, %p70
    %p72 = scmp.ne.s32.totalorder %s60, %s61
    %p73 = scmp.eq.s32.totalorder %s16, 3
    %p74 = por %p72, %p73
    %p76 = scmp.ne.s32.totalorder %s61, %s75
    %p77 = scmp.eq.s32.totalorder %s16, 0
    %p78 = por %p76, %p77
    %s80 = sadd.s32 %s79, 1
    %p83 = scmp.eq.s32.totalorder %s10, 3
    %p84 = scmp.ne.s32.totalorder %s79, %s81
    %p85 = scmp.eq.s32.totalorder %s10, 0
    %p86 = por %p84, %p85
    %p87 = scmp.ne.s32.totalorder %s79, %s81
    %p88 = scmp.eq.s32.totalorder %s15, 3
    %p89 = por %p87, %p88
    %p90 = scmp.ne.s32.totalorder %s81, %s82
    %p91 = scmp.eq.s32.totalorder %s15, 0
    %p92 = por %p90, %p91
    %p93 = scmp.ne.s32.totalorder %s81, %s82
    %p94 = scmp.eq.s32.totalorder %s16, 3
    %p95 = por %p93, %p94
    %p97 = scmp.ne.s32.totalorder %s82, %s96
    %p98 = scmp.eq.s32.totalorder %s16, 0
    %p99 = por %p97, %p98
    %s101 = sadd.s32 %s100, 1
    %p104 = scmp.eq.s32.totalorder %s10, 3
    %p105 = scmp.ne.s32.totalorder %s100, %s102
    %p106 = scmp.eq.s32.totalorder %s10, 0
    %p107 = por %p105, %p106
    %p108 = scmp.ne.s32.totalorder %s100, %s102
    %p109 = scmp.eq.s32.totalorder %s15, 3
    %p110 = por %p108, %p109
    %p111 = scmp.ne.s32.totalorder %s102, %s103
    %p112 = scmp.eq.s32.totalorder %s15, 0
    %p113 = por %p111, %p112
    %p114 = scmp.ne.s32.totalorder %s102, %s103
    %p115 = scmp.eq.s32.totalorder %s16, 3
    %p116 = por %p114, %p115
    %p118 = scmp.ne.s32.totalorder %s103, %s117
    %p119 = scmp.eq.s32.totalorder %s16, 0
    %p120 = por %p118, %p119
    %s121 = ssub.s32 %s17, %s29
    %p122 = scmp.eq.s32.totalorder %s121, 0
    %s124 = sadd.s32 %s123, 1
    %s125 = scalar_select %p122, %s123, %s124
    %p128 = pneg %p122
    %p129 = scmp.eq.s32.totalorder %s10, 3
    %p130 = por %p128, %p129
    %p131 = scmp.ne.s32.totalorder %s123, %s126
    %p132 = scmp.eq.s32.totalorder %s10, 0
    %p133 = por %p131, %p132
    %p134 = scmp.ne.s32.totalorder %s123, %s126
    %p135 = scmp.eq.s32.totalorder %s15, 3
    %p136 = por %p134, %p135
    %p137 = scmp.ne.s32.totalorder %s126, %s127
    %p138 = scmp.eq.s32.totalorder %s15, 0
    %p139 = por %p137, %p138
    %p140 = scmp.ne.s32.totalorder %s126, %s127
    %p141 = scmp.eq.s32.totalorder %s16, 3
    %p142 = por %p140, %p141
    %p144 = scmp.ne.s32.totalorder %s127, %s143
    %p145 = scmp.eq.s32.totalorder %s16, 0
    %p146 = por %p144, %p145
    %p147 = scmp.le.s32.totalorder 1, %s10
    %p148 = scmp.lt.s32.totalorder %s10, 5
    %p149 = pnand %p147, %p148
    %p150 = pneg %p149
    // Predicated region
    $region9: #{perceptual_loss.1} parent=5 // pred_check
      _
    $region10: #{perceptual_loss.1} parent=5 // pred_check_branch
      %152 = sbr.rel (%p149) target = $region12
    $region11: #{perceptual_loss.1} parent=5 // pred_region
      %s153 = ssub.s32 %s10, 1
      // Predicated region
      $region13: #{perceptual_loss.1} parent=11 // pred_check
        %p154 = pneg %p71
      $region14: #{perceptual_loss.1} parent=11 // pred_check_branch
        %156 = sbr.rel (%p154) target = $region16
      $region15: #{perceptual_loss.1} parent=11 // pred_region
        _
      $region16: #{perceptual_loss.1} parent=11 // pred_fallthru
        _
      // Predicated region
      $region17: #{perceptual_loss.1} parent=11 // pred_check
        %p157 = pneg %p92
      $region18: #{perceptual_loss.1} parent=11 // pred_check_branch
        %159 = sbr.rel (%p157) target = $region20
      $region19: #{perceptual_loss.1} parent=11 // pred_region
        _
      $region20: #{perceptual_loss.1} parent=11 // pred_fallthru
        _
      // Predicated region
      $region21: #{perceptual_loss.1} parent=11 // pred_check
        %p160 = pneg %p113
      $region22: #{perceptual_loss.1} parent=11 // pred_check_branch
        %162 = sbr.rel (%p160) target = $region24
      $region23: #{perceptual_loss.1} parent=11 // pred_region
        _
      $region24: #{perceptual_loss.1} parent=11 // pred_fallthru
        _
    $region12: #{perceptual_loss.1} parent=5 // pred_fallthru
      _
    %p163 = scmp.lt.s32.totalorder %s10, 4
    // Predicated region
    $region25: #{perceptual_loss.1} parent=5 // pred_check
      %p164 = pneg %p163
    $region26: #{perceptual_loss.1} parent=5 // pred_check_branch
      %166 = sbr.rel (%p164) target = $region28
    $region27: #{perceptual_loss.1} parent=5 // pred_region
      // Predicated region
      $region29: #{perceptual_loss.1} parent=27 // pred_check
        %p167 = pneg %p44
      $region30: #{perceptual_loss.1} parent=27 // pred_check_branch
        %169 = sbr.rel (%p167) target = $region32
      $region31: #{perceptual_loss.1} parent=27 // pred_region
        %s170 = smul.u32 8, %s18
        %p171 = scmp.lt.s32.totalorder %s17, 3
        %s172 = scalar_select %p171, %s17, 3
        %p173 = scmp.lt.s32.totalorder %s170, 7
        %s174 = scalar_select %p173, %s170, 7
        %s175 = smul.addr %s172, 8
        %s176 = sadd.s32 %s174, %s175
        %s177 = smul.addr %s176, 4
        %s178 = scalar_lea.vmem %s0, %s177
        %s179 = smul.u32 8, %s18
      $region32: #{perceptual_loss.1} parent=27 // pred_fallthru
        _
    $region28: #{perceptual_loss.1} parent=5 // pred_fallthru
      _
    %p180 = scmp.le.s32.totalorder 1, %s10
    %p181 = scmp.lt.s32.totalorder %s10, 5
    %p182 = pnand %p180, %p181
    %p183 = pneg %p182
    // Predicated region
    $region33: #{perceptual_loss.1} parent=5 // pred_check
      _
    $region34: #{perceptual_loss.1} parent=5 // pred_check_branch
      %185 = sbr.rel (%p182) target = $region36
    $region35: #{perceptual_loss.1} parent=5 // pred_region
      %s186 = ssub.s32 %s10, 1
      %s187 = smul.u32 8, %s20
      %p188 = scmp.lt.s32.totalorder %s19, 3
      %s189 = scalar_select %p188, %s19, 3
      %p190 = scmp.lt.s32.totalorder %s187, 7
      %s191 = scalar_select %p190, %s187, 7
      %s192 = smul.addr %s189, 8
      %s193 = sadd.s32 %s191, %s192
      %s194 = smul.addr %s193, 4
      %s195 = scalar_lea.vmem %s0, %s194
      %p196 = pneg %p50
      %p197 = pneg %p47
      %p198 = pneg %p71
      %p199 = pneg %p68
      %p200 = pneg %p92
      %p201 = pneg %p89
      %p202 = pneg %p113
      %p203 = pneg %p110
      %p204 = pneg %p139
      %p205 = pneg %p136
      %p206 = scmp.lt.s32.totalorder %s19, 3
      %s207 = scalar_select %p206, %s19, 3
      %s208 = scalar_lea.vmem %s4, %s207
      %s209 = smul.u32 8, %s20
      %p210 = scmp.lt.s32.totalorder %s19, 3
      %s211 = scalar_select %p210, %s19, 3
      %p212 = scmp.lt.s32.totalorder %s209, 7
      %s213 = scalar_select %p212, %s209, 7
      %s214 = smul.addr %s211, 8
      %s215 = sadd.s32 %s213, %s214
      %s216 = smul.addr %s215, 4
      %s217 = scalar_lea.vmem %s0, %s216
      %s218 = smul.u32 8, %s20
      %p219 = scmp.lt.s32.totalorder %s19, 3
      %s220 = scalar_select %p219, %s19, 3
      %s221 = scalar_lea.vmem %s4, %s220
      %p222 = scmp.eq.s32.totalorder %s20, 0
      // Predicated region
      $region37: #{perceptual_loss.1} parent=35 // pred_check
        %p223 = pneg %p222
      $region38: #{perceptual_loss.1} parent=35 // pred_check_branch
        %225 = sbr.rel (%p223) target = $region40
      $region39: #{perceptual_loss.1} parent=35 // pred_region
        %226 = vst [vmem:[#allocation2] sm:$0x1] 0.0
      $region40: #{perceptual_loss.1} parent=35 // pred_fallthru
        _
      %v227 = vld [vmem:[%s217] sm:$0xf]
      %v228 = vld [vmem:[%s217 + $0x4] sm:$0xf]
      %v229 = vld [vmem:[%s217 + $0x8] sm:$0xf]
      %v230 = vld [vmem:[%s217 + $0xc] sm:$0xf]
      %v231 = vld [vmem:[%s217 + $0x10] sm:$0xf]
      %v232 = vld [vmem:[%s217 + $0x14] sm:$0xf]
      %v233 = vld [vmem:[%s217 + $0x18] sm:$0xf]
      %v234 = vld [vmem:[%s217 + $0x1c] sm:$0xf]
      %v235 = vld [vmem:[%s1] sm:$0xf]
      %v236 = vld [vmem:[%s1 + $0x4] sm:$0xf]
      %v237 = vld [vmem:[%s1 + $0x8] sm:$0xf]
      %v238 = vld [vmem:[%s1 + $0xc] sm:$0xf]
      %v239 = vld [vmem:[%s1 + $0x10] sm:$0xf]
      %v240 = vld [vmem:[%s1 + $0x14] sm:$0xf]
      %v241 = vld [vmem:[%s1 + $0x18] sm:$0xf]
      %v242 = vld [vmem:[%s1 + $0x1c] sm:$0xf]
      %v243 = vld [vmem:[%s1 + $0x20] sm:$0xf]
      %v244 = vld [vmem:[%s1 + $0x24] sm:$0xf]
      %v245 = vld [vmem:[%s1 + $0x28] sm:$0xf]
      %v246 = vld [vmem:[%s1 + $0x2c] sm:$0xf]
      %v247 = vld [vmem:[%s1 + $0x30] sm:$0xf]
      %v248 = vld [vmem:[%s1 + $0x34] sm:$0xf]
      %v249 = vld [vmem:[%s1 + $0x38] sm:$0xf]
      %v250 = vld [vmem:[%s1 + $0x3c] sm:$0xf]
      %v259 = vunpack.c.l.b16 %v227
      %v260 = vunpack.c.l.b16 %v228
      %v261 = vunpack.c.l.b16 %v229
      %v262 = vunpack.c.l.b16 %v230
      %v263 = vunpack.c.l.b16 %v231
      %v264 = vunpack.c.l.b16 %v232
      %v265 = vunpack.c.l.b16 %v233
      %v266 = vunpack.c.l.b16 %v234
      %v267 = vpack.c.b16 %v260, %v259
      %v268 = vpack.c.b16 %v262, %v261
      %v269 = vpack.c.b16 %v264, %v263
      %v270 = vpack.c.b16 %v266, %v265
      %v291 = vunpack.c.l.b16 %v235
      %v292 = vunpack.c.l.b16 %v236
      %v293 = vunpack.c.l.b16 %v237
      %v294 = vunpack.c.l.b16 %v238
      %v295 = vunpack.c.l.b16 %v239
      %v296 = vunpack.c.l.b16 %v240
      %v297 = vunpack.c.l.b16 %v241
      %v298 = vunpack.c.l.b16 %v242
      %v299 = vunpack.c.l.b16 %v243
      %v300 = vunpack.c.l.b16 %v244
      %v301 = vunpack.c.l.b16 %v245
      %v302 = vunpack.c.l.b16 %v246
      %v303 = vunpack.c.l.b16 %v247
      %v304 = vunpack.c.l.b16 %v248
      %v305 = vunpack.c.l.b16 %v249
      %v306 = vunpack.c.l.b16 %v250
      %v307 = vpack.c.b16 %v292, %v291
      %v308 = vpack.c.b16 %v294, %v293
      %v309 = vpack.c.b16 %v296, %v295
      %v310 = vpack.c.b16 %v298, %v297
      %v311 = vpack.c.b16 %v300, %v299
      %v312 = vpack.c.b16 %v302, %v301
      %v313 = vpack.c.b16 %v304, %v303
      %v314 = vpack.c.b16 %v306, %v305
      %323 = vmatpush.bf16.msra.mxu0 %v314
      %324 = vmatpush.bf16.msra.mxu0 %v313
      %325 = vmatpush.bf16.msra.mxu0 %v312
      %326 = vmatpush.bf16.msra.mxu0 %v311
      %327 = vmatpush.bf16.msra.mxu0 %v310
      %328 = vmatpush.bf16.msra.mxu0 %v309
      %329 = vmatpush.bf16.msra.mxu0 %v308
      %330 = vmatpush.bf16.msra.mxu0 %v307
      %331 = vmatmul.bf16.gmra.mxu0 %v267
      %v332 = vpop.f32.mrf.mxu0
      %v333 = vadd.f32 0.0, %v332
      %v334 = vpop.f32.mrf.mxu0
      %v335 = vadd.f32 0.0, %v334
      %336 = vmatmul.bf16.gmra.mxu0 %v268
      %v337 = vpop.f32.mrf.mxu0
      %v338 = vadd.f32 0.0, %v337
      %v339 = vpop.f32.mrf.mxu0
      %v340 = vadd.f32 0.0, %v339
      %341 = vmatmul.bf16.gmra.mxu0 %v269
      %v342 = vpop.f32.mrf.mxu0
      %v343 = vadd.f32 0.0, %v342
      %v344 = vpop.f32.mrf.mxu0
      %v345 = vadd.f32 0.0, %v344
      %346 = vmatmul.bf16.gmra.mxu0 %v270
      %v347 = vpop.f32.mrf.mxu0
      %v348 = vadd.f32 0.0, %v347
      %v349 = vpop.f32.mrf.mxu0
      %v350 = vadd.f32 0.0, %v349
      %351 = vdwg.mxu0
      %v352 = vmax.f32 %v333, 0.0
      %v353 = vmax.f32 %v335, 0.0
      %v354 = vmax.f32 %v338, 0.0
      %v355 = vmax.f32 %v340, 0.0
      %v356 = vmax.f32 %v343, 0.0
      %v357 = vmax.f32 %v345, 0.0
      %v358 = vmax.f32 %v348, 0.0
      %v359 = vmax.f32 %v350, 0.0
      %v360 = vld [vmem:[#allocation2] sm:$0x1]
      %v361 = vadd.f32 %v352, %v353
      %v362 = vadd.f32 %v361, %v354
      %v363 = vadd.f32 %v362, %v355
      %v364 = vadd.f32 %v363, %v356
      %v365 = vadd.f32 %v364, %v357
      %v366 = vadd.f32 %v365, %v358
      %v367 = vadd.f32 %v366, %v359
      %v368 = vrot.slane %v367, 4
      %v369 = vadd.f32 %v367, %v368
      %v370 = vrot.slane %v369, 2
      %v371 = vadd.f32 %v369, %v370
      %v372 = vrot.slane %v371, 1
      %v373 = vadd.f32 %v371, %v372
      %v374 = vadd.f32 %v360, %v373
      %375 = vst [vmem:[#allocation2] sm:$0x1] %v374
      // Predicated region
      $region41: #{perceptual_loss.1} parent=35 // pred_check
        %p376 = pneg %p222
      $region42: #{perceptual_loss.1} parent=35 // pred_check_branch
        %378 = sbr.rel (%p376) target = $region44
      $region43: #{perceptual_loss.1} parent=35 // pred_region
        %v379 = vld [vmem:[#allocation2] sm:$0x1]
        %v380 = vmul.f32 %v379, 0.00390625
        %v381 = vld [vmem:[%s2] sm:$0xff]
        %v382 = vld [vmem:[%s2 + $0x8] sm:$0xff]
        %v383 = vld [vmem:[%s2 + $0x10] sm:$0xff]
        %v384 = vld [vmem:[%s2 + $0x18] sm:$0xff]
        %v385 = vld [vmem:[%s2 + $0x20] sm:$0xff]
        %v386 = vld [vmem:[%s2 + $0x28] sm:$0xff]
        %v387 = vld [vmem:[%s2 + $0x30] sm:$0xff]
        %v388 = vld [vmem:[%s2 + $0x38] sm:$0xff]
        %v389 = vld [vmem:[%s2 + $0x40] sm:$0xff]
        %v390 = vld [vmem:[%s2 + $0x48] sm:$0xff]
        %v391 = vld [vmem:[%s2 + $0x50] sm:$0xff]
        %v392 = vld [vmem:[%s2 + $0x58] sm:$0xff]
        %v393 = vld [vmem:[%s2 + $0x60] sm:$0xff]
        %v394 = vld [vmem:[%s2 + $0x68] sm:$0xff]
        %v395 = vld [vmem:[%s2 + $0x70] sm:$0xff]
        %v396 = vld [vmem:[%s2 + $0x78] sm:$0xff]
        %v397 = vld [vmem:[%s3] sm:$0x1]
        %398 = vmatpush.msra.mxu0 %v396
        %399 = vmatpush.msra.mxu0 %v395
        %400 = vmatpush.msra.mxu0 %v394
        %401 = vmatpush.msra.mxu0 %v393
        %402 = vmatpush.msra.mxu0 %v392
        %403 = vmatpush.msra.mxu0 %v391
        %404 = vmatpush.msra.mxu0 %v390
        %405 = vmatpush.msra.mxu0 %v389
        %406 = vmatpush.msra.mxu0 %v388
        %407 = vmatpush.msra.mxu0 %v387
        %408 = vmatpush.msra.mxu0 %v386
        %409 = vmatpush.msra.mxu0 %v385
        %410 = vmatpush.msra.mxu0 %v384
        %411 = vmatpush.msra.mxu0 %v383
        %412 = vmatpush.msra.mxu0 %v382
        %413 = vmatpush.msra.mxu0 %v381
        %414 = vmatmul.f32.gmra.mxu0 %v380
        %v415 = vpop.f32.mrf.mxu0
        %v416 = vadd.f32 %v397, %v415
        %417 = vdwg.mxu0
        %418 = vst [vmem:[%s221] sm:$0x1] %v416
      $region44: #{perceptual_loss.1} parent=35 // pred_fallthru
        _
      %p419 = scmp.lt.s32.totalorder %s19, 3
      %s420 = scalar_select %p419, %s19, 3
      %s421 = scalar_lea.vmem %s4, %s420
      // Predicated region
      $region45: #{perceptual_loss.1} parent=35 // pred_check
        %p422 = pneg %p136
      $region46: #{perceptual_loss.1} parent=35 // pred_check_branch
        %424 = sbr.rel (%p422) target = $region48
      $region47: #{perceptual_loss.1} parent=35 // pred_region
        _
      $region48: #{perceptual_loss.1} parent=35 // pred_fallthru
        _
    $region36: #{perceptual_loss.1} parent=5 // pred_fallthru
      _
    %p425 = scmp.le.s32.totalorder 2, %s10
    // Predicated region
    $region49: #{perceptual_loss.1} parent=5 // pred_check
      %p426 = pneg %p425
    $region50: #{perceptual_loss.1} parent=5 // pred_check_branch
      %428 = sbr.rel (%p426) target = $region52
    $region51: #{perceptual_loss.1} parent=5 // pred_region
      %s429 = ssub.s32 %s10, 2
      // Predicated region
      $region53: #{perceptual_loss.1} parent=51 // pred_check
        %p430 = pneg %p142
      $region54: #{perceptual_loss.1} parent=51 // pred_check_branch
        %432 = sbr.rel (%p430) target = $region56
      $region55: #{perceptual_loss.1} parent=51 // pred_region
        %p433 = scmp.lt.s32.totalorder %s21, 3
        %s434 = scalar_select %p433, %s21, 3
        %s435 = scalar_lea.vmem %s4, %s434
      $region56: #{perceptual_loss.1} parent=51 // pred_fallthru
        _
    $region52: #{perceptual_loss.1} parent=5 // pred_fallthru
      _
  $region6: #{perceptual_loss.1} parent=0 // loop_footer
    %s14 = sadd.s32 1, %s10
  $region7: #{perceptual_loss.1} parent=0 // loop_footer_branch
    %9 = sbr.rel target = $region3
  $region8: #{perceptual_loss.1} parent=0 // loop_exit
    _

</llo_original>
